<compile_context>
chip_gen: v5e
topology: v5e:2x2
jax: 0.10.0
libtpu: 0.0.40
codegen_flags: <defaults>
</compile_context>

<pallas_src>
import jax
import jax.numpy as jnp
import numpy as np
from jax.experimental import pallas as pl
from jax.experimental.pallas import tpu as pltpu


def _round_up(v, m):
    return (v + m - 1) // m * m


def cgcnn_kernel(x_ref, msg_ref, dst_ref, w_ref, b_ref, out_ref):
    """One (node-tile, edge-tile) grid step.

    x_ref  : [TN, F_pad]   residual node features (resident across edge steps)
    msg_ref: [TE, K]       concat(x[src], x[dst], dist) for this edge tile
    dst_ref: [1,  TE]      int32 destination node id per edge (-1 for padded edges)
    w_ref  : [K,  2*F_pad] fused [Wf | Ws] weight (zero-padded columns)
    b_ref  : [1,  2*F_pad] fused [bf | bs] bias
    out_ref: [TN, F_pad]   env + m_sum accumulator (resident across edge steps)
    """
    ei = pl.program_id(1)
    tn, f_pad = out_ref.shape
    te = msg_ref.shape[0]

    # residual init: out = env, once per node tile
    @pl.when(ei == 0)
    def _init():
        out_ref[...] = x_ref[...]

    # fused gate/value linear: a single MXU pass over this edge tile
    pre = jnp.dot(msg_ref[...], w_ref[...], preferred_element_type=jnp.float32) + b_ref[...]
    f_pre = pre[:, :f_pad]
    s_pre = pre[:, f_pad:]

    # sigmoid(f) * softplus(s); the reciprocal goes to the EUP
    # (approx=True is available if ~1e-4 relative error is acceptable).
    sig = pl.reciprocal(1.0 + jnp.exp(-f_pre), approx=False)
    sp = jnp.maximum(s_pre, 0.0) + jnp.log1p(jnp.exp(-jnp.abs(s_pre)))
    gate = sig * sp                                                      # [TE, F_pad]

    # destination-sum: build a per-tile one-hot in VMEM (never touches HBM) from the
    # int32 dst ids and reduce on the MXU.  Padded edges carry dst = -1 -> no match.
    base = pl.program_id(0) * tn
    node_ids = base + jax.lax.broadcasted_iota(jnp.int32, (tn, te), 0)   # [TN, TE]
    onehot = (node_ids == dst_ref[...]).astype(jnp.float32)              # [TN, TE]
    out_ref[...] += jnp.dot(onehot, gate, preferred_element_type=jnp.float32)


def cg_cnn_layer(x, src, dst, dist, wf, bf, ws, bs, *, edge_tile=512, node_tile=256):
    """Pallas-backed forward of CG_CNN_Layer.

    x    : [N, F]   float32 node features ('env')
    src  : [E]      int32 edge source node ids
    dst  : [E]      int32 edge destination node ids (messages are summed per dst)
    dist : [E, 10]  float32 edge features
    wf,ws: [2F+10, F] float32, input-major (y = x @ W + b == PyTorch x @ W.T + b)
    bf,bs: [F]      float32
    """
    n, feat = x.shape
    e = src.shape[0]
    k = 2 * feat + 10

    f_pad = _round_up(feat, 128)                  # lane-dense gate/value/output columns
    tn = min(node_tile, _round_up(n, 8))          # node tile (multiple of 8)
    n_pad = _round_up(n, tn)
    te = min(edge_tile, _round_up(e, 128))        # edge tile (multiple of 128)
    e_pad = _round_up(e, te)

    # ---- glue: pure indexing / zero-padding, no hot-path math ----------------------
    # TODO(synk): for very large graphs, replace this host-side gather with an
    # in-kernel DMA gather driven by scalar-prefetched edge ids (PrefetchScalarGridSpec).
    msg_in = jnp.concatenate([x[src], x[dst], dist], axis=-1).astype(jnp.float32)  # [E, K]
    msg_pad = jnp.zeros((e_pad, k), jnp.float32).at[:e, :].set(msg_in)

    dst_pad = jnp.full((1, e_pad), -1, jnp.int32).at[0, :e].set(dst.astype(jnp.int32))

    w_cat = jnp.zeros((k, 2 * f_pad), jnp.float32)
    w_cat = w_cat.at[:, :feat].set(wf).at[:, f_pad:f_pad + feat].set(ws)
    b_cat = jnp.zeros((1, 2 * f_pad), jnp.float32)
    b_cat = b_cat.at[0, :feat].set(bf).at[0, f_pad:f_pad + feat].set(bs)

    x_pad = jnp.zeros((n_pad, f_pad), jnp.float32).at[:n, :feat].set(x)

    out = pl.pallas_call(
        cgcnn_kernel,
        out_shape=jax.ShapeDtypeStruct((n_pad, f_pad), jnp.float32),
        grid=(n_pad // tn, e_pad // te),
        in_specs=[
            pl.BlockSpec((tn, f_pad), lambda ni, ei: (ni, 0)),        # x (residual)
            pl.BlockSpec((te, k), lambda ni, ei: (ei, 0)),            # msg_in edge tile
            pl.BlockSpec((1, te), lambda ni, ei: (0, ei)),            # dst ids tile
            pl.BlockSpec((k, 2 * f_pad), lambda ni, ei: (0, 0)),      # fused weights
            pl.BlockSpec((1, 2 * f_pad), lambda ni, ei: (0, 0)),      # fused bias
        ],
        out_specs=pl.BlockSpec((tn, f_pad), lambda ni, ei: (ni, 0)),
        compiler_params=pltpu.CompilerParams(
            dimension_semantics=("parallel", "arbitrary")),
    )(x_pad, msg_pad, dst_pad, w_cat, b_cat)

    return out[:n, :feat]


def _reference(x, src, dst, dist, wf, bf, ws, bs):
    """Pure-JAX reference matching the PyTorch semantics."""
    msg_in = jnp.concatenate([x[src], x[dst], dist], axis=-1)
    f_pre = msg_in @ wf + bf
    s_pre = msg_in @ ws + bs
    msg = jax.nn.sigmoid(f_pre) * jax.nn.softplus(s_pre)
    m_sum = jnp.zeros_like(x).at[dst].add(msg)
    return x + m_sum


if __name__ == "__main__":
    key = jax.random.PRNGKey(0)
    k_x, k_dist, k_src, k_dst, k_wf, k_bf, k_ws, k_bs = jax.random.split(key, 8)

    # small synthetic graph consistent with the module's shapes
    N = 8            # nodes
    E = 24           # edges
    F = 16           # in_feats
    D_IN = 2 * F + 10

    x = jax.random.normal(k_x, (N, F), dtype=jnp.float32)
    dist = jax.random.normal(k_dist, (E, 10), dtype=jnp.float32)
    src = jax.random.randint(k_src, (E,), 0, N, dtype=jnp.int32)
    dst = jax.random.randint(k_dst, (E,), 0, N, dtype=jnp.int32)

    # deterministic synthetic parameters (nn.Linear(2F+10, F) x 2), stored input-major
    bound = 1.0 / np.sqrt(D_IN)
    wf = jax.random.uniform(k_wf, (D_IN, F), minval=-bound, maxval=bound, dtype=jnp.float32)
    bf = jax.random.uniform(k_bf, (F,), minval=-bound, maxval=bound, dtype=jnp.float32)
    ws = jax.random.uniform(k_ws, (D_IN, F), minval=-bound, maxval=bound, dtype=jnp.float32)
    bs = jax.random.uniform(k_bs, (F,), minval=-bound, maxval=bound, dtype=jnp.float32)

    out = cg_cnn_layer(x, src, dst, dist, wf, bf, ws, bs)
    out = jax.block_until_ready(out)

    ref = _reference(x, src, dst, dist, wf, bf, ws, bs)
    assert out.shape == (N, F)
    assert np.allclose(np.asarray(out), np.asarray(ref), atol=1e-5, rtol=1e-5)

    print("KERNEL_OK")
</pallas_src>

<mosaic_0001>
module attributes {stable_mosaic.version = 11 : i64} {
  func.func @cgcnn_kernel(%arg0: i32, %arg1: i32, %arg2: memref<8x128xf32, #tpu.memory_space<vmem>>, %arg3: memref<128x42xf32, #tpu.memory_space<vmem>>, %arg4: memref<1x128xi32, #tpu.memory_space<vmem>>, %arg5: memref<42x256xf32, #tpu.memory_space<vmem>>, %arg6: memref<1x256xf32, #tpu.memory_space<vmem>>, %arg7: memref<8x128xf32, #tpu.memory_space<vmem>>) attributes {dimension_semantics = [#tpu.dimension_semantics<parallel>, #tpu.dimension_semantics<arbitrary>], iteration_bounds = array<i64: 1, 1>, scalar_prefetch = 0 : i64, scratch_operands = 0 : i64, tpu.core_type = #tpu.core_type<tc>, window_params = [{transform_indices = @transform_0, window_bounds = array<i64: 8, 128>}, {transform_indices = @transform_1, window_bounds = array<i64: 128, 42>}, {transform_indices = @transform_2, window_bounds = array<i64: 1, 128>}, {pipeline_mode = #tpu.pipeline_mode<synchronous>, transform_indices = @transform_3, window_bounds = array<i64: 42, 256>}, {pipeline_mode = #tpu.pipeline_mode<synchronous>, transform_indices = @transform_4, window_bounds = array<i64: 1, 256>}, {transform_indices = @transform_5, window_bounds = array<i64: 8, 128>}]} {
    %c0_i32 = arith.constant 0 : i32
    %0 = arith.cmpi eq, %arg1, %c0_i32 : i32
    %1 = arith.extui %0 : i1 to i32
    %c0_i32_0 = arith.constant 0 : i32
    %2 = arith.cmpi ne, %1, %c0_i32_0 : i32
    scf.if %2 {
      %c0_17 = arith.constant 0 : index
      %c0_18 = arith.constant 0 : index
      %39 = vector.load %arg2[%c0_17, %c0_18] : memref<8x128xf32, #tpu.memory_space<vmem>>, vector<8x128xf32>
      %c0_19 = arith.constant 0 : index
      %c0_20 = arith.constant 0 : index
      %40 = vector.load %arg7[%c0_19, %c0_20] : memref<8x128xf32, #tpu.memory_space<vmem>>, vector<8x128xf32>
      tpu.vector_store %arg7[%c0_19, %c0_20], %39 {strides = array<i32>} : memref<8x128xf32, #tpu.memory_space<vmem>>, vector<8x128xf32>,
    } else {
    }
    %c0 = arith.constant 0 : index
    %c0_1 = arith.constant 0 : index
    %3 = vector.load %arg3[%c0, %c0_1] : memref<128x42xf32, #tpu.memory_space<vmem>>, vector<128x42xf32>
    %c0_2 = arith.constant 0 : index
    %c0_3 = arith.constant 0 : index
    %4 = vector.load %arg5[%c0_2, %c0_3] : memref<42x256xf32, #tpu.memory_space<vmem>>, vector<42x256xf32>
    %cst = arith.constant dense<0.000000e+00> : vector<128x256xf32>
    %5 = tpu.matmul %3, %4, %cst {dimension_numbers = #tpu.dot_dimension_numbers<[1], [0], [0], [1], [0, 0, 1, 1], [], []>} : vector<128x42xf32>, vector<42x256xf32>, vector<128x256xf32> -> vector<128x256xf32>
    %c0_4 = arith.constant 0 : index
    %c0_5 = arith.constant 0 : index
    %6 = vector.load %arg6[%c0_4, %c0_5] : memref<1x256xf32, #tpu.memory_space<vmem>>, vector<1x256xf32>
    %7 = vector.broadcast %6 : vector<1x256xf32> to vector<128x256xf32>
    %8 = arith.addf %5, %7 : vector<128x256xf32>
    %9 = vector.extract_strided_slice %8 {offsets = [0, 0], sizes = [128, 128], strides = [1, 1]} : vector<128x256xf32> to vector<128x128xf32>
    %10 = vector.extract_strided_slice %8 {offsets = [0, 128], sizes = [128, 128], strides = [1, 1]} : vector<128x256xf32> to vector<128x128xf32>
    %cst_6 = arith.constant 0.000000e+00 : f32
    %11 = vector.broadcast %cst_6 : f32 to vector<128x128xf32>
    %12 = arith.subf %11, %9 : vector<128x128xf32>
    %13 = math.exp %12 : vector<128x128xf32>
    %cst_7 = arith.constant 1.000000e+00 : f32
    %14 = vector.broadcast %cst_7 : f32 to vector<128x128xf32>
    %15 = arith.addf %14, %13 : vector<128x128xf32>
    %16 = tpu.reciprocal %15 : vector<128x128xf32> -> vector<128x128xf32>
    %cst_8 = arith.constant 0.000000e+00 : f32
    %17 = vector.broadcast %cst_8 : f32 to vector<128x128xf32>
    %18 = arith.maximumf %10, %17 : vector<128x128xf32>
    %19 = math.absf %10 : vector<128x128xf32>
    %cst_9 = arith.constant 0.000000e+00 : f32
    %20 = vector.broadcast %cst_9 : f32 to vector<128x128xf32>
    %21 = arith.subf %20, %19 : vector<128x128xf32>
    %22 = math.exp %21 : vector<128x128xf32>
    %23 = math.log1p %22 : vector<128x128xf32>
    %24 = arith.addf %18, %23 : vector<128x128xf32>
    %25 = arith.mulf %16, %24 : vector<128x128xf32>
    %c8_i32 = arith.constant 8 : i32
    %26 = arith.muli %arg0, %c8_i32 : i32
    %27 = tpu.iota {dimensions = array<i32: 0>} : vector<8x128xi32>
    %28 = vector.broadcast %26 : i32 to vector<8x128xi32>
    %29 = arith.addi %28, %27 : vector<8x128xi32>
    %c0_10 = arith.constant 0 : index
    %c0_11 = arith.constant 0 : index
    %30 = vector.load %arg4[%c0_10, %c0_11] : memref<1x128xi32, #tpu.memory_space<vmem>>, vector<1x128xi32>
    %31 = vector.broadcast %30 : vector<1x128xi32> to vector<8x128xi32>
    %32 = arith.cmpi eq, %29, %31 : vector<8x128xi32>
    %33 = arith.extui %32 : vector<8x128xi1> to vector<8x128xi32>
    %34 = arith.sitofp %33 : vector<8x128xi32> to vector<8x128xf32>
    %c0_12 = arith.constant 0 : index
    %c0_13 = arith.constant 0 : index
    %35 = vector.load %arg7[%c0_12, %c0_13] : memref<8x128xf32, #tpu.memory_space<vmem>>, vector<8x128xf32>
    %cst_14 = arith.constant dense<0.000000e+00> : vector<8x128xf32>
    %36 = tpu.matmul %34, %25, %cst_14 {dimension_numbers = #tpu.dot_dimension_numbers<[1], [0], [0], [1], [0, 0, 1, 1], [], []>} : vector<8x128xf32>, vector<128x128xf32>, vector<8x128xf32> -> vector<8x128xf32>
    %37 = arith.addf %35, %36 : vector<8x128xf32>
    %c0_15 = arith.constant 0 : index
    %c0_16 = arith.constant 0 : index
    %38 = vector.load %arg7[%c0_15, %c0_16] : memref<8x128xf32, #tpu.memory_space<vmem>>, vector<8x128xf32>
    tpu.vector_store %arg7[%c0_15, %c0_16], %37 {strides = array<i32>} : memref<8x128xf32, #tpu.memory_space<vmem>>, vector<8x128xf32>,
    return
  }
  func.func @transform_0(%arg0: i32, %arg1: i32) -> (i32, i32) {
    %c0_i32 = arith.constant 0 : i32
    %c0_i32_0 = arith.constant 0 : i32
    return %arg0, %c0_i32 : i32, i32
  }
  func.func @transform_1(%arg0: i32, %arg1: i32) -> (i32, i32) {
    %c0_i32 = arith.constant 0 : i32
    %c0_i32_0 = arith.constant 0 : i32
    return %arg1, %c0_i32 : i32, i32
  }
  func.func @transform_2(%arg0: i32, %arg1: i32) -> (i32, i32) {
    %c0_i32 = arith.constant 0 : i32
    %c0_i32_0 = arith.constant 0 : i32
    return %c0_i32, %arg1 : i32, i32
  }
  func.func @transform_3(%arg0: i32, %arg1: i32) -> (i32, i32) {
    %c0_i32 = arith.constant 0 : i32
    %c0_i32_0 = arith.constant 0 : i32
    %c0_i32_1 = arith.constant 0 : i32
    return %c0_i32, %c0_i32_0 : i32, i32
  }
  func.func @transform_4(%arg0: i32, %arg1: i32) -> (i32, i32) {
    %c0_i32 = arith.constant 0 : i32
    %c0_i32_0 = arith.constant 0 : i32
    %c0_i32_1 = arith.constant 0 : i32
    return %c0_i32, %c0_i32_0 : i32, i32
  }
  func.func @transform_5(%arg0: i32, %arg1: i32) -> (i32, i32) {
    %c0_i32 = arith.constant 0 : i32
    %c0_i32_0 = arith.constant 0 : i32
    return %arg0, %c0_i32 : i32, i32
  }
}

</mosaic_0001>

<llo_original>
// kernel: tpu_custom_call.1
$region0: #{tpu_custom_call.1}
  #allocation0 [shape = 'u32[]', space=smem, size = 0x4, offset = 0x4, fixed_abs, tag = 'smem constant byte address 0x4 - core index']
  #allocation1 [shape = 'u32[72,128]{1,0:T(1,128)}', space=vmem, size = 0x9000, scoped, tag = 'internal scratch']
  %s0 = inlined_call_operand.vmem [shape: f32[8,128], index: 0, kind: input, shape index: {}]
  %s1 = inlined_call_operand.vmem [shape: f32[128,42], index: 1, kind: input, shape index: {}]
  %s2 = inlined_call_operand.vmem [shape: s32[1,128], index: 2, kind: input, shape index: {}]
  %s3 = inlined_call_operand.vmem [shape: f32[42,256], index: 3, kind: input, shape index: {}]
  %s4 = inlined_call_operand.vmem [shape: f32[1,256], index: 4, kind: input, shape index: {}]
  %s5 = inlined_call_operand.hbm [shape: f32[8,128], index: 5, kind: output, shape index: {}]
  %s6 = sld [smem:[#allocation0]]
  $region34: #{tpu_custom_call.1} parent=0
    _
  %s8 = ssub.s32 1, %s6
  %s9 = scalar_select 0, %s8, %s6
  $region1: #{tpu_custom_call.1} parent=0
    #allocation2 [shape = 'u8[4096]{0}', space=vmem, size = 0x1000, scoped, tag = 'output window, operand 0, single buffered']
    #allocation3 [shape = 's32[1]{0}', space=sflag, size = 0x4, scoped, tag = 'scoped memory for tpu_custom_call.1']
    %10 = vsyncpa [#allocation3], 0
    // Predicated region
    $region2: #{tpu_custom_call.1} parent=1 // pred_check
      _
    $region3: #{tpu_custom_call.1} parent=1 // pred_check_branch
      %12 = sbr.rel (0) target = $region5
    $region4: #{tpu_custom_call.1} parent=1 // pred_region
      _
    $region5: #{tpu_custom_call.1} parent=1 // pred_fallthru
      _
    // Predicated region
    $region6: #{tpu_custom_call.1} parent=1 // pred_check
      _
    $region7: #{tpu_custom_call.1} parent=1 // pred_check_branch
      %14 = sbr.rel (0) target = $region9
    $region8: #{tpu_custom_call.1} parent=1 // pred_region
      _
    $region9: #{tpu_custom_call.1} parent=1 // pred_fallthru
      _
    // Predicated region
    $region10: #{tpu_custom_call.1} parent=1 // pred_check
      _
    $region11: #{tpu_custom_call.1} parent=1 // pred_check_branch
      %16 = sbr.rel (0) target = $region13
    $region12: #{tpu_custom_call.1} parent=1 // pred_region
      _
    $region13: #{tpu_custom_call.1} parent=1 // pred_fallthru
      _
    // Predicated region
    $region14: #{tpu_custom_call.1} parent=1 // pred_check
      _
    $region15: #{tpu_custom_call.1} parent=1 // pred_check_branch
      %18 = sbr.rel (0) target = $region17
    $region16: #{tpu_custom_call.1} parent=1 // pred_region
      _
    $region17: #{tpu_custom_call.1} parent=1 // pred_fallthru
      _
    // Predicated region
    $region18: #{tpu_custom_call.1} parent=1 // pred_check
      _
    $region19: #{tpu_custom_call.1} parent=1 // pred_check_branch
      %20 = sbr.rel (0) target = $region21
    $region20: #{tpu_custom_call.1} parent=1 // pred_region
      _
    $region21: #{tpu_custom_call.1} parent=1 // pred_fallthru
      _
    %p21 = scmp.eq.s32.totalorder 0, 0
    // Predicated region
    $region22: #{tpu_custom_call.1} parent=1 // pred_check
      %p22 = pneg %p21
    $region23: #{tpu_custom_call.1} parent=1 // pred_check_branch
      %24 = sbr.rel (%p22) target = $region25
    $region24: #{tpu_custom_call.1} parent=1 // pred_region
      %v25 = vld [vmem:[%s0] sm:$0xff]
      %26 = vst [vmem:[#allocation2] sm:$0xff] %v25
    $region25: #{tpu_custom_call.1} parent=1 // pred_fallthru
      _
    %v27 = vld [vmem:[%s1] sm:$0xff]
    %v28 = vld [vmem:[%s1 + $0x8] sm:$0xff]
    %v29 = vld [vmem:[%s1 + $0x10] sm:$0xff]
    %v30 = vld [vmem:[%s1 + $0x18] sm:$0xff]
    %v31 = vld [vmem:[%s1 + $0x20] sm:$0xff]
    %v32 = vld [vmem:[%s1 + $0x28] sm:$0xff]
    %v33 = vld [vmem:[%s1 + $0x30] sm:$0xff]
    %v34 = vld [vmem:[%s1 + $0x38] sm:$0xff]
    %v35 = vld [vmem:[%s1 + $0x40] sm:$0xff]
    %v36 = vld [vmem:[%s1 + $0x48] sm:$0xff]
    %v37 = vld [vmem:[%s1 + $0x50] sm:$0xff]
    %v38 = vld [vmem:[%s1 + $0x58] sm:$0xff]
    %v39 = vld [vmem:[%s1 + $0x60] sm:$0xff]
    %v40 = vld [vmem:[%s1 + $0x68] sm:$0xff]
    %v41 = vld [vmem:[%s1 + $0x70] sm:$0xff]
    %v42 = vld [vmem:[%s1 + $0x78] sm:$0xff]
    %v43 = vld [vmem:[%s3] sm:$0xff]
    %v44 = vld [vmem:[%s3 + $0x8] sm:$0xff]
    %v45 = vld [vmem:[%s3 + $0x10] sm:$0xff]
    %v46 = vld [vmem:[%s3 + $0x18] sm:$0xff]
    %v47 = vld [vmem:[%s3 + $0x20] sm:$0xff]
    %v48 = vld [vmem:[%s3 + $0x28] sm:$0xff]
    %v49 = vld [vmem:[%s3 + $0x30] sm:$0xff]
    %v50 = vld [vmem:[%s3 + $0x38] sm:$0xff]
    %v51 = vld [vmem:[%s3 + $0x40] sm:$0xff]
    %v52 = vld [vmem:[%s3 + $0x48] sm:$0xff]
    %v53 = vld [vmem:[%s3 + $0x50] sm:$0x3]
    %v54 = vld [vmem:[%s3 + $0x58] sm:$0x3]
    %v55 = vld [vmem:[%s4] sm:$0x3]
    %v57 = vperm.slane %v55, 0
    %v58 = vperm.slane %v55, 1
    %vm61 = vcmask 343040
    %v63 = vsel %vm61, %v27, 0
    %v66 = vsel %vm61, %v28, 0
    %v69 = vsel %vm61, %v29, 0
    %v72 = vsel %vm61, %v30, 0
    %v75 = vsel %vm61, %v31, 0
    %v78 = vsel %vm61, %v32, 0
    %v81 = vsel %vm61, %v33, 0
    %v84 = vsel %vm61, %v34, 0
    %v87 = vsel %vm61, %v35, 0
    %v90 = vsel %vm61, %v36, 0
    %v93 = vsel %vm61, %v37, 0
    %v96 = vsel %vm61, %v38, 0
    %v99 = vsel %vm61, %v39, 0
    %v102 = vsel %vm61, %v40, 0
    %v105 = vsel %vm61, %v41, 0
    %v108 = vsel %vm61, %v42, 0
    %vm110 = vcmask 1041408
    %v112 = vsel %vm110, %v53, 0
    %v115 = vsel %vm110, %v54, 0
    %117 = vmatpush.msra.mxu0 0.0
    %118 = vmatpush.msra.mxu0 0.0
    %119 = vmatpush.msra.mxu0 0.0
    %120 = vmatpush.msra.mxu0 0.0
    %121 = vmatpush.msra.mxu0 0.0
    %122 = vmatpush.msra.mxu0 0.0
    %123 = vmatpush.msra.mxu0 0.0
    %124 = vmatpush.msra.mxu0 0.0
    %125 = vmatpush.msra.mxu0 0.0
    %126 = vmatpush.msra.mxu0 0.0
    %127 = vmatpush.msra.mxu0 %v112
    %128 = vmatpush.msra.mxu0 %v51
    %129 = vmatpush.msra.mxu0 %v49
    %130 = vmatpush.msra.mxu0 %v47
    %131 = vmatpush.msra.mxu0 %v45
    %132 = vmatpush.msra.mxu0 %v43
    %133 = vmatmul.f32.gmra.mxu0 %v63
    %v134 = vpop.f32.mrf.mxu0
    %v135 = vadd.f32 %v57, %v134
    %136 = vmatmul.f32.gmra.mxu0 %v66
    %v137 = vpop.f32.mrf.mxu0
    %v138 = vadd.f32 %v57, %v137
    %139 = vmatmul.f32.gmra.mxu0 %v69
    %v140 = vpop.f32.mrf.mxu0
    %v141 = vadd.f32 %v57, %v140
    %142 = vmatmul.f32.gmra.mxu0 %v72
    %v143 = vpop.f32.mrf.mxu0
    %v144 = vadd.f32 %v57, %v143
    %145 = vmatmul.f32.gmra.mxu0 %v75
    %v146 = vpop.f32.mrf.mxu0
    %v147 = vadd.f32 %v57, %v146
    %148 = vmatmul.f32.gmra.mxu0 %v78
    %v149 = vpop.f32.mrf.mxu0
    %v150 = vadd.f32 %v57, %v149
    %151 = vmatmul.f32.gmra.mxu0 %v81
    %v152 = vpop.f32.mrf.mxu0
    %v153 = vadd.f32 %v57, %v152
    %154 = vmatmul.f32.gmra.mxu0 %v84
    %v155 = vpop.f32.mrf.mxu0
    %v156 = vadd.f32 %v57, %v155
    %157 = vmatmul.f32.gmra.mxu0 %v87
    %v158 = vpop.f32.mrf.mxu0
    %v159 = vadd.f32 %v57, %v158
    %160 = vmatmul.f32.gmra.mxu0 %v90
    %v161 = vpop.f32.mrf.mxu0
    %v162 = vadd.f32 %v57, %v161
    %163 = vmatmul.f32.gmra.mxu0 %v93
    %v164 = vpop.f32.mrf.mxu0
    %v165 = vadd.f32 %v57, %v164
    %166 = vmatmul.f32.gmra.mxu0 %v96
    %v167 = vpop.f32.mrf.mxu0
    %v168 = vadd.f32 %v57, %v167
    %169 = vmatmul.f32.gmra.mxu0 %v99
    %v170 = vpop.f32.mrf.mxu0
    %v171 = vadd.f32 %v57, %v170
    %172 = vmatmul.f32.gmra.mxu0 %v102
    %v173 = vpop.f32.mrf.mxu0
    %v174 = vadd.f32 %v57, %v173
    %175 = vmatmul.f32.gmra.mxu0 %v105
    %v176 = vpop.f32.mrf.mxu0
    %v177 = vadd.f32 %v57, %v176
    %178 = vmatmul.f32.gmra.mxu0 %v108
    %v179 = vpop.f32.mrf.mxu0
    %v180 = vadd.f32 %v57, %v179
    %181 = vdwg.mxu0
    %182 = vmatpush.msra.mxu0 0.0
    %183 = vmatpush.msra.mxu0 0.0
    %184 = vmatpush.msra.mxu0 0.0
    %185 = vmatpush.msra.mxu0 0.0
    %186 = vmatpush.msra.mxu0 0.0
    %187 = vmatpush.msra.mxu0 0.0
    %188 = vmatpush.msra.mxu0 0.0
    %189 = vmatpush.msra.mxu0 0.0
    %190 = vmatpush.msra.mxu0 0.0
    %191 = vmatpush.msra.mxu0 0.0
    %192 = vmatpush.msra.mxu0 %v115
    %193 = vmatpush.msra.mxu0 %v52
    %194 = vmatpush.msra.mxu0 %v50
    %195 = vmatpush.msra.mxu0 %v48
    %196 = vmatpush.msra.mxu0 %v46
    %197 = vmatpush.msra.mxu0 %v44
    %198 = vmatmul.f32.gmra.mxu0 %v63
    %v199 = vpop.f32.mrf.mxu0
    %v200 = vadd.f32 %v58, %v199
    %201 = vmatmul.f32.gmra.mxu0 %v66
    %v202 = vpop.f32.mrf.mxu0
    %v203 = vadd.f32 %v58, %v202
    %204 = vmatmul.f32.gmra.mxu0 %v69
    %v205 = vpop.f32.mrf.mxu0
    %v206 = vadd.f32 %v58, %v205
    %207 = vmatmul.f32.gmra.mxu0 %v72
    %v208 = vpop.f32.mrf.mxu0
    %v209 = vadd.f32 %v58, %v208
    %210 = vmatmul.f32.gmra.mxu0 %v75
    %v211 = vpop.f32.mrf.mxu0
    %v212 = vadd.f32 %v58, %v211
    %213 = vmatmul.f32.gmra.mxu0 %v78
    %v214 = vpop.f32.mrf.mxu0
    %v215 = vadd.f32 %v58, %v214
    %216 = vmatmul.f32.gmra.mxu0 %v81
    %v217 = vpop.f32.mrf.mxu0
    %v218 = vadd.f32 %v58, %v217
    %219 = vmatmul.f32.gmra.mxu0 %v84
    %v220 = vpop.f32.mrf.mxu0
    %v221 = vadd.f32 %v58, %v220
    %222 = vmatmul.f32.gmra.mxu0 %v87
    %v223 = vpop.f32.mrf.mxu0
    %v224 = vadd.f32 %v58, %v223
    %225 = vmatmul.f32.gmra.mxu0 %v90
    %v226 = vpop.f32.mrf.mxu0
    %v227 = vadd.f32 %v58, %v226
    %228 = vmatmul.f32.gmra.mxu0 %v93
    %v229 = vpop.f32.mrf.mxu0
    %v230 = vadd.f32 %v58, %v229
    %231 = vmatmul.f32.gmra.mxu0 %v96
    %v232 = vpop.f32.mrf.mxu0
    %v233 = vadd.f32 %v58, %v232
    %234 = vmatmul.f32.gmra.mxu0 %v99
    %v235 = vpop.f32.mrf.mxu0
    %v236 = vadd.f32 %v58, %v235
    %237 = vmatmul.f32.gmra.mxu0 %v102
    %v238 = vpop.f32.mrf.mxu0
    %v239 = vadd.f32 %v58, %v238
    %240 = vmatmul.f32.gmra.mxu0 %v105
    %v241 = vpop.f32.mrf.mxu0
    %v242 = vadd.f32 %v58, %v241
    %243 = vmatmul.f32.gmra.mxu0 %v108
    %v244 = vpop.f32.mrf.mxu0
    %v245 = vadd.f32 %v58, %v244
    %246 = vdwg.mxu0
    %v247 = vsub.f32 0.0, %v135
    %v248 = vsub.f32 0.0, %v138
    %v249 = vsub.f32 0.0, %v141
    %v250 = vsub.f32 0.0, %v144
    %v251 = vsub.f32 0.0, %v147
    %v252 = vsub.f32 0.0, %v150
    %v253 = vsub.f32 0.0, %v153
    %v254 = vsub.f32 0.0, %v156
    %v255 = vsub.f32 0.0, %v159
    %v256 = vsub.f32 0.0, %v162
    %v257 = vsub.f32 0.0, %v165
    %v258 = vsub.f32 0.0, %v168
    %v259 = vsub.f32 0.0, %v171
    %v260 = vsub.f32 0.0, %v174
    %v261 = vsub.f32 0.0, %v177
    %v262 = vsub.f32 0.0, %v180
    %v263 = vmul.f32 %v247, 1.442695
    %v264 = vpow.pop %v263
    %v265 = vmul.f32 %v248, 1.442695
    %v266 = vpow.pop %v265
    %v267 = vmul.f32 %v249, 1.442695
    %v268 = vpow.pop %v267
    %v269 = vmul.f32 %v250, 1.442695
    %v270 = vpow.pop %v269
    %v271 = vmul.f32 %v251, 1.442695
    %v272 = vpow.pop %v271
    %v273 = vmul.f32 %v252, 1.442695
    %v274 = vpow.pop %v273
    %v275 = vmul.f32 %v253, 1.442695
    %v276 = vpow.pop %v275
    %v277 = vmul.f32 %v254, 1.442695
    %v278 = vpow.pop %v277
    %v279 = vmul.f32 %v255, 1.442695
    %v280 = vpow.pop %v279
    %v281 = vmul.f32 %v256, 1.442695
    %v282 = vpow.pop %v281
    %v283 = vmul.f32 %v257, 1.442695
    %v284 = vpow.pop %v283
    %v285 = vmul.f32 %v258, 1.442695
    %v286 = vpow.pop %v285
    %v287 = vmul.f32 %v259, 1.442695
    %v288 = vpow.pop %v287
    %v289 = vmul.f32 %v260, 1.442695
    %v290 = vpow.pop %v289
    %v291 = vmul.f32 %v261, 1.442695
    %v292 = vpow.pop %v291
    %v293 = vmul.f32 %v262, 1.442695
    %v294 = vpow.pop %v293
    %v295 = vadd.f32 %v264, 1.0
    %v296 = vadd.f32 %v266, 1.0
    %v297 = vadd.f32 %v268, 1.0
    %v298 = vadd.f32 %v270, 1.0
    %v299 = vadd.f32 %v272, 1.0
    %v300 = vadd.f32 %v274, 1.0
    %v301 = vadd.f32 %v276, 1.0
    %v302 = vadd.f32 %v278, 1.0
    %v303 = vadd.f32 %v280, 1.0
    %v304 = vadd.f32 %v282, 1.0
    %v305 = vadd.f32 %v284, 1.0
    %v306 = vadd.f32 %v286, 1.0
    %v307 = vadd.f32 %v288, 1.0
    %v308 = vadd.f32 %v290, 1.0
    %v309 = vadd.f32 %v292, 1.0
    %v310 = vadd.f32 %v294, 1.0
    %v311 = vrcp.pop %v295
    %v312 = vmul.f32 %v295, %v311
    %v313 = vsub.f32 1.0, %v312
    %v314 = vmul.f32 %v311, %v313
    %v315 = vadd.f32 %v311, %v314
    %vm316 = vweird.f32 %v295
    %vm317 = vweird.f32 %v311
    %vm318 = vmor %vm316, %vm317
    %v319 = vsel %vm318, %v311, %v315
    %v320 = vand.u32 2147483647, %v295
    %vm321 = vcmp.eq.f32.partialorder %v320, 8.507059e+37
    %v322 = vand.u32 %v295, 2147483648
    %v323 = vor.u32 1.1754944e-38, %v322
    %v324 = vsel %vm321, %v323, %v319
    %v325 = vrcp.pop %v296
    %v326 = vmul.f32 %v296, %v325
    %v327 = vsub.f32 1.0, %v326
    %v328 = vmul.f32 %v325, %v327
    %v329 = vadd.f32 %v325, %v328
    %vm330 = vweird.f32 %v296
    %vm331 = vweird.f32 %v325
    %vm332 = vmor %vm330, %vm331
    %v333 = vsel %vm332, %v325, %v329
    %v334 = vand.u32 2147483647, %v296
    %vm335 = vcmp.eq.f32.partialorder %v334, 8.507059e+37
    %v336 = vand.u32 %v296, 2147483648
    %v337 = vor.u32 1.1754944e-38, %v336
    %v338 = vsel %vm335, %v337, %v333
    %v339 = vrcp.pop %v297
    %v340 = vmul.f32 %v297, %v339
    %v341 = vsub.f32 1.0, %v340
    %v342 = vmul.f32 %v339, %v341
    %v343 = vadd.f32 %v339, %v342
    %vm344 = vweird.f32 %v297
    %vm345 = vweird.f32 %v339
    %vm346 = vmor %vm344, %vm345
    %v347 = vsel %vm346, %v339, %v343
    %v348 = vand.u32 2147483647, %v297
    %vm349 = vcmp.eq.f32.partialorder %v348, 8.507059e+37
    %v350 = vand.u32 %v297, 2147483648
    %v351 = vor.u32 1.1754944e-38, %v350
    %v352 = vsel %vm349, %v351, %v347
    %v353 = vrcp.pop %v298
    %v354 = vmul.f32 %v298, %v353
    %v355 = vsub.f32 1.0, %v354
    %v356 = vmul.f32 %v353, %v355
    %v357 = vadd.f32 %v353, %v356
    %vm358 = vweird.f32 %v298
    %vm359 = vweird.f32 %v353
    %vm360 = vmor %vm358, %vm359
    %v361 = vsel %vm360, %v353, %v357
    %v362 = vand.u32 2147483647, %v298
    %vm363 = vcmp.eq.f32.partialorder %v362, 8.507059e+37
    %v364 = vand.u32 %v298, 2147483648
    %v365 = vor.u32 1.1754944e-38, %v364
    %v366 = vsel %vm363, %v365, %v361
    %v367 = vrcp.pop %v299
    %v368 = vmul.f32 %v299, %v367
    %v369 = vsub.f32 1.0, %v368
    %v370 = vmul.f32 %v367, %v369
    %v371 = vadd.f32 %v367, %v370
    %vm372 = vweird.f32 %v299
    %vm373 = vweird.f32 %v367
    %vm374 = vmor %vm372, %vm373
    %v375 = vsel %vm374, %v367, %v371
    %v376 = vand.u32 2147483647, %v299
    %vm377 = vcmp.eq.f32.partialorder %v376, 8.507059e+37
    %v378 = vand.u32 %v299, 2147483648
    %v379 = vor.u32 1.1754944e-38, %v378
    %v380 = vsel %vm377, %v379, %v375
    %v381 = vrcp.pop %v300
    %v382 = vmul.f32 %v300, %v381
    %v383 = vsub.f32 1.0, %v382
    %v384 = vmul.f32 %v381, %v383
    %v385 = vadd.f32 %v381, %v384
    %vm386 = vweird.f32 %v300
    %vm387 = vweird.f32 %v381
    %vm388 = vmor %vm386, %vm387
    %v389 = vsel %vm388, %v381, %v385
    %v390 = vand.u32 2147483647, %v300
    %vm391 = vcmp.eq.f32.partialorder %v390, 8.507059e+37
    %v392 = vand.u32 %v300, 2147483648
    %v393 = vor.u32 1.1754944e-38, %v392
    %v394 = vsel %vm391, %v393, %v389
    %v395 = vrcp.pop %v301
    %v396 = vmul.f32 %v301, %v395
    %v397 = vsub.f32 1.0, %v396
    %v398 = vmul.f32 %v395, %v397
    %v399 = vadd.f32 %v395, %v398
    %vm400 = vweird.f32 %v301
    %vm401 = vweird.f32 %v395
    %vm402 = vmor %vm400, %vm401
    %v403 = vsel %vm402, %v395, %v399
    %v404 = vand.u32 2147483647, %v301
    %vm405 = vcmp.eq.f32.partialorder %v404, 8.507059e+37
    %v406 = vand.u32 %v301, 2147483648
    %v407 = vor.u32 1.1754944e-38, %v406
    %v408 = vsel %vm405, %v407, %v403
    %v409 = vrcp.pop %v302
    %v410 = vmul.f32 %v302, %v409
    %v411 = vsub.f32 1.0, %v410
    %v412 = vmul.f32 %v409, %v411
    %v413 = vadd.f32 %v409, %v412
    %vm414 = vweird.f32 %v302
    %vm415 = vweird.f32 %v409
    %vm416 = vmor %vm414, %vm415
    %v417 = vsel %vm416, %v409, %v413
    %v418 = vand.u32 2147483647, %v302
    %vm419 = vcmp.eq.f32.partialorder %v418, 8.507059e+37
    %v420 = vand.u32 %v302, 2147483648
    %v421 = vor.u32 1.1754944e-38, %v420
    %v422 = vsel %vm419, %v421, %v417
    %v423 = vrcp.pop %v303
    %v424 = vmul.f32 %v303, %v423
    %v425 = vsub.f32 1.0, %v424
    %v426 = vmul.f32 %v423, %v425
    %v427 = vadd.f32 %v423, %v426
    %vm428 = vweird.f32 %v303
    %vm429 = vweird.f32 %v423
    %vm430 = vmor %vm428, %vm429
    %v431 = vsel %vm430, %v423, %v427
    %v432 = vand.u32 2147483647, %v303
    %vm433 = vcmp.eq.f32.partialorder %v432, 8.507059e+37
    %v434 = vand.u32 %v303, 2147483648
    %v435 = vor.u32 1.1754944e-38, %v434
    %v436 = vsel %vm433, %v435, %v431
    %v437 = vrcp.pop %v304
    %v438 = vmul.f32 %v304, %v437
    %v439 = vsub.f32 1.0, %v438
    %v440 = vmul.f32 %v437, %v439
    %v441 = vadd.f32 %v437, %v440
    %vm442 = vweird.f32 %v304
    %vm443 = vweird.f32 %v437
    %vm444 = vmor %vm442, %vm443
    %v445 = vsel %vm444, %v437, %v441
    %v446 = vand.u32 2147483647, %v304
    %vm447 = vcmp.eq.f32.partialorder %v446, 8.507059e+37
    %v448 = vand.u32 %v304, 2147483648
    %v449 = vor.u32 1.1754944e-38, %v448
    %v450 = vsel %vm447, %v449, %v445
    %v451 = vrcp.pop %v305
    %v452 = vmul.f32 %v305, %v451
    %v453 = vsub.f32 1.0, %v452
    %v454 = vmul.f32 %v451, %v453
    %v455 = vadd.f32 %v451, %v454
    %vm456 = vweird.f32 %v305
    %vm457 = vweird.f32 %v451
    %vm458 = vmor %vm456, %vm457
    %v459 = vsel %vm458, %v451, %v455
    %v460 = vand.u32 2147483647, %v305
    %vm461 = vcmp.eq.f32.partialorder %v460, 8.507059e+37
    %v462 = vand.u32 %v305, 2147483648
    %v463 = vor.u32 1.1754944e-38, %v462
    %v464 = vsel %vm461, %v463, %v459
    %v465 = vrcp.pop %v306
    %v466 = vmul.f32 %v306, %v465
    %v467 = vsub.f32 1.0, %v466
    %v468 = vmul.f32 %v465, %v467
    %v469 = vadd.f32 %v465, %v468
    %vm470 = vweird.f32 %v306
    %vm471 = vweird.f32 %v465
    %vm472 = vmor %vm470, %vm471
    %v473 = vsel %vm472, %v465, %v469
    %v474 = vand.u32 2147483647, %v306
    %vm475 = vcmp.eq.f32.partialorder %v474, 8.507059e+37
    %v476 = vand.u32 %v306, 2147483648
    %v477 = vor.u32 1.1754944e-38, %v476
    %v478 = vsel %vm475, %v477, %v473
    %v479 = vrcp.pop %v307
    %v480 = vmul.f32 %v307, %v479
    %v481 = vsub.f32 1.0, %v480
    %v482 = vmul.f32 %v479, %v481
    %v483 = vadd.f32 %v479, %v482
    %vm484 = vweird.f32 %v307
    %vm485 = vweird.f32 %v479
    %vm486 = vmor %vm484, %vm485
    %v487 = vsel %vm486, %v479, %v483
    %v488 = vand.u32 2147483647, %v307
    %vm489 = vcmp.eq.f32.partialorder %v488, 8.507059e+37
    %v490 = vand.u32 %v307, 2147483648
    %v491 = vor.u32 1.1754944e-38, %v490
    %v492 = vsel %vm489, %v491, %v487
    %v493 = vrcp.pop %v308
    %v494 = vmul.f32 %v308, %v493
    %v495 = vsub.f32 1.0, %v494
    %v496 = vmul.f32 %v493, %v495
    %v497 = vadd.f32 %v493, %v496
    %vm498 = vweird.f32 %v308
    %vm499 = vweird.f32 %v493
    %vm500 = vmor %vm498, %vm499
    %v501 = vsel %vm500, %v493, %v497
    %v502 = vand.u32 2147483647, %v308
    %vm503 = vcmp.eq.f32.partialorder %v502, 8.507059e+37
    %v504 = vand.u32 %v308, 2147483648
    %v505 = vor.u32 1.1754944e-38, %v504
    %v506 = vsel %vm503, %v505, %v501
    %v507 = vrcp.pop %v309
    %v508 = vmul.f32 %v309, %v507
    %v509 = vsub.f32 1.0, %v508
    %v510 = vmul.f32 %v507, %v509
    %v511 = vadd.f32 %v507, %v510
    %vm512 = vweird.f32 %v309
    %vm513 = vweird.f32 %v507
    %vm514 = vmor %vm512, %vm513
    %v515 = vsel %vm514, %v507, %v511
    %v516 = vand.u32 2147483647, %v309
    %vm517 = vcmp.eq.f32.partialorder %v516, 8.507059e+37
    %v518 = vand.u32 %v309, 2147483648
    %v519 = vor.u32 1.1754944e-38, %v518
    %v520 = vsel %vm517, %v519, %v515
    %v521 = vrcp.pop %v310
    %v522 = vmul.f32 %v310, %v521
    %v523 = vsub.f32 1.0, %v522
    %v524 = vmul.f32 %v521, %v523
    %v525 = vadd.f32 %v521, %v524
    %vm526 = vweird.f32 %v310
    %vm527 = vweird.f32 %v521
    %vm528 = vmor %vm526, %vm527
    %v529 = vsel %vm528, %v521, %v525
    %v530 = vand.u32 2147483647, %v310
    %vm531 = vcmp.eq.f32.partialorder %v530, 8.507059e+37
    %v532 = vand.u32 %v310, 2147483648
    %v533 = vor.u32 1.1754944e-38, %v532
    %v534 = vsel %vm531, %v533, %v529
    %v535 = vmax.f32 %v200, 0.0
    %v536 = vmax.f32 %v203, 0.0
    %v537 = vmax.f32 %v206, 0.0
    %v538 = vmax.f32 %v209, 0.0
    %v539 = vmax.f32 %v212, 0.0
    %v540 = vmax.f32 %v215, 0.0
    %v541 = vmax.f32 %v218, 0.0
    %v542 = vmax.f32 %v221, 0.0
    %v543 = vmax.f32 %v224, 0.0
    %v544 = vmax.f32 %v227, 0.0
    %v545 = vmax.f32 %v230, 0.0
    %v546 = vmax.f32 %v233, 0.0
    %v547 = vmax.f32 %v236, 0.0
    %v548 = vmax.f32 %v239, 0.0
    %v549 = vmax.f32 %v242, 0.0
    %v550 = vmax.f32 %v245, 0.0
    %v551 = vand.u32 2147483647, %v200
    %v552 = vand.u32 2147483647, %v203
    %v553 = vand.u32 2147483647, %v206
    %v554 = vand.u32 2147483647, %v209
    %v555 = vand.u32 2147483647, %v212
    %v556 = vand.u32 2147483647, %v215
    %v557 = vand.u32 2147483647, %v218
    %v558 = vand.u32 2147483647, %v221
    %v559 = vand.u32 2147483647, %v224
    %v560 = vand.u32 2147483647, %v227
    %v561 = vand.u32 2147483647, %v230
    %v562 = vand.u32 2147483647, %v233
    %v563 = vand.u32 2147483647, %v236
    %v564 = vand.u32 2147483647, %v239
    %v565 = vand.u32 2147483647, %v242
    %v566 = vand.u32 2147483647, %v245
    %v567 = vsub.f32 0.0, %v551
    %v568 = vsub.f32 0.0, %v552
    %v569 = vsub.f32 0.0, %v553
    %v570 = vsub.f32 0.0, %v554
    %v571 = vsub.f32 0.0, %v555
    %v572 = vsub.f32 0.0, %v556
    %v573 = vsub.f32 0.0, %v557
    %v574 = vsub.f32 0.0, %v558
    %v575 = vsub.f32 0.0, %v559
    %v576 = vsub.f32 0.0, %v560
    %v577 = vsub.f32 0.0, %v561
    %v578 = vsub.f32 0.0, %v562
    %v579 = vsub.f32 0.0, %v563
    %v580 = vsub.f32 0.0, %v564
    %v581 = vsub.f32 0.0, %v565
    %v582 = vsub.f32 0.0, %v566
    %v583 = vmul.f32 %v567, 1.442695
    %v584 = vpow.pop %v583
    %v585 = vmul.f32 %v568, 1.442695
    %v586 = vpow.pop %v585
    %v587 = vmul.f32 %v569, 1.442695
    %v588 = vpow.pop %v587
    %v589 = vmul.f32 %v570, 1.442695
    %v590 = vpow.pop %v589
    %v591 = vmul.f32 %v571, 1.442695
    %v592 = vpow.pop %v591
    %v593 = vmul.f32 %v572, 1.442695
    %v594 = vpow.pop %v593
    %v595 = vmul.f32 %v573, 1.442695
    %v596 = vpow.pop %v595
    %v597 = vmul.f32 %v574, 1.442695
    %v598 = vpow.pop %v597
    %v599 = vmul.f32 %v575, 1.442695
    %v600 = vpow.pop %v599
    %v601 = vmul.f32 %v576, 1.442695
    %v602 = vpow.pop %v601
    %v603 = vmul.f32 %v577, 1.442695
    %v604 = vpow.pop %v603
    %v605 = vmul.f32 %v578, 1.442695
    %v606 = vpow.pop %v605
    %v607 = vmul.f32 %v579, 1.442695
    %v608 = vpow.pop %v607
    %v609 = vmul.f32 %v580, 1.442695
    %v610 = vpow.pop %v609
    %v611 = vmul.f32 %v581, 1.442695
    %v612 = vpow.pop %v611
    %v613 = vmul.f32 %v582, 1.442695
    %v614 = vpow.pop %v613
    %v615 = vadd.f32 %v584, 1.0
    %v616 = vlog2.pop %v615
    %v617 = vmul.f32 %v616, 0.6931472
    %v618 = vmul.f32 -0.5, %v584
    %v619 = vadd.f32 %v618, 1.0
    %v620 = vmul.f32 %v619, %v584
    %v621 = vand.u32 2147483647, %v584
    %vm622 = vcmp.lt.f32.partialorder %v621, 0.0004427343
    %v623 = vsel %vm622, %v620, %v617
    %v624 = vadd.f32 %v586, 1.0
    %v625 = vlog2.pop %v624
    %v626 = vmul.f32 %v625, 0.6931472
    %v627 = vmul.f32 -0.5, %v586
    %v628 = vadd.f32 %v627, 1.0
    %v629 = vmul.f32 %v628, %v586
    %v630 = vand.u32 2147483647, %v586
    %vm631 = vcmp.lt.f32.partialorder %v630, 0.0004427343
    %v632 = vsel %vm631, %v629, %v626
    %v633 = vadd.f32 %v588, 1.0
    %v634 = vlog2.pop %v633
    %v635 = vmul.f32 %v634, 0.6931472
    %v636 = vmul.f32 -0.5, %v588
    %v637 = vadd.f32 %v636, 1.0
    %v638 = vmul.f32 %v637, %v588
    %v639 = vand.u32 2147483647, %v588
    %vm640 = vcmp.lt.f32.partialorder %v639, 0.0004427343
    %v641 = vsel %vm640, %v638, %v635
    %v642 = vadd.f32 %v590, 1.0
    %v643 = vlog2.pop %v642
    %v644 = vmul.f32 %v643, 0.6931472
    %v645 = vmul.f32 -0.5, %v590
    %v646 = vadd.f32 %v645, 1.0
    %v647 = vmul.f32 %v646, %v590
    %v648 = vand.u32 2147483647, %v590
    %vm649 = vcmp.lt.f32.partialorder %v648, 0.0004427343
    %v650 = vsel %vm649, %v647, %v644
    %v651 = vadd.f32 %v592, 1.0
    %v652 = vlog2.pop %v651
    %v653 = vmul.f32 %v652, 0.6931472
    %v654 = vmul.f32 -0.5, %v592
    %v655 = vadd.f32 %v654, 1.0
    %v656 = vmul.f32 %v655, %v592
    %v657 = vand.u32 2147483647, %v592
    %vm658 = vcmp.lt.f32.partialorder %v657, 0.0004427343
    %v659 = vsel %vm658, %v656, %v653
    %v660 = vadd.f32 %v594, 1.0
    %v661 = vlog2.pop %v660
    %v662 = vmul.f32 %v661, 0.6931472
    %v663 = vmul.f32 -0.5, %v594
    %v664 = vadd.f32 %v663, 1.0
    %v665 = vmul.f32 %v664, %v594
    %v666 = vand.u32 2147483647, %v594
    %vm667 = vcmp.lt.f32.partialorder %v666, 0.0004427343
    %v668 = vsel %vm667, %v665, %v662
    %v669 = vadd.f32 %v596, 1.0
    %v670 = vlog2.pop %v669
    %v671 = vmul.f32 %v670, 0.6931472
    %v672 = vmul.f32 -0.5, %v596
    %v673 = vadd.f32 %v672, 1.0
    %v674 = vmul.f32 %v673, %v596
    %v675 = vand.u32 2147483647, %v596
    %vm676 = vcmp.lt.f32.partialorder %v675, 0.0004427343
    %v677 = vsel %vm676, %v674, %v671
    %v678 = vadd.f32 %v598, 1.0
    %v679 = vlog2.pop %v678
    %v680 = vmul.f32 %v679, 0.6931472
    %v681 = vmul.f32 -0.5, %v598
    %v682 = vadd.f32 %v681, 1.0
    %v683 = vmul.f32 %v682, %v598
    %v684 = vand.u32 2147483647, %v598
    %vm685 = vcmp.lt.f32.partialorder %v684, 0.0004427343
    %v686 = vsel %vm685, %v683, %v680
    %v687 = vadd.f32 %v600, 1.0
    %v688 = vlog2.pop %v687
    %v689 = vmul.f32 %v688, 0.6931472
    %v690 = vmul.f32 -0.5, %v600
    %v691 = vadd.f32 %v690, 1.0
    %v692 = vmul.f32 %v691, %v600
    %v693 = vand.u32 2147483647, %v600
    %vm694 = vcmp.lt.f32.partialorder %v693, 0.0004427343
    %v695 = vsel %vm694, %v692, %v689
    %v696 = vadd.f32 %v602, 1.0
    %v697 = vlog2.pop %v696
    %v698 = vmul.f32 %v697, 0.6931472
    %v699 = vmul.f32 -0.5, %v602
    %v700 = vadd.f32 %v699, 1.0
    %v701 = vmul.f32 %v700, %v602
    %v702 = vand.u32 2147483647, %v602
    %vm703 = vcmp.lt.f32.partialorder %v702, 0.0004427343
    %v704 = vsel %vm703, %v701, %v698
    %v705 = vadd.f32 %v604, 1.0
    %v706 = vlog2.pop %v705
    %v707 = vmul.f32 %v706, 0.6931472
    %v708 = vmul.f32 -0.5, %v604
    %v709 = vadd.f32 %v708, 1.0
    %v710 = vmul.f32 %v709, %v604
    %v711 = vand.u32 2147483647, %v604
    %vm712 = vcmp.lt.f32.partialorder %v711, 0.0004427343
    %v713 = vsel %vm712, %v710, %v707
    %v714 = vadd.f32 %v606, 1.0
    %v715 = vlog2.pop %v714
    %v716 = vmul.f32 %v715, 0.6931472
    %v717 = vmul.f32 -0.5, %v606
    %v718 = vadd.f32 %v717, 1.0
    %v719 = vmul.f32 %v718, %v606
    %v720 = vand.u32 2147483647, %v606
    %vm721 = vcmp.lt.f32.partialorder %v720, 0.0004427343
    %v722 = vsel %vm721, %v719, %v716
    %v723 = vadd.f32 %v608, 1.0
    %v724 = vlog2.pop %v723
    %v725 = vmul.f32 %v724, 0.6931472
    %v726 = vmul.f32 -0.5, %v608
    %v727 = vadd.f32 %v726, 1.0
    %v728 = vmul.f32 %v727, %v608
    %v729 = vand.u32 2147483647, %v608
    %vm730 = vcmp.lt.f32.partialorder %v729, 0.0004427343
    %v731 = vsel %vm730, %v728, %v725
    %v732 = vadd.f32 %v610, 1.0
    %v733 = vlog2.pop %v732
    %v734 = vmul.f32 %v733, 0.6931472
    %v735 = vmul.f32 -0.5, %v610
    %v736 = vadd.f32 %v735, 1.0
    %v737 = vmul.f32 %v736, %v610
    %v738 = vand.u32 2147483647, %v610
    %vm739 = vcmp.lt.f32.partialorder %v738, 0.0004427343
    %v740 = vsel %vm739, %v737, %v734
    %v741 = vadd.f32 %v612, 1.0
    %v742 = vlog2.pop %v741
    %v743 = vmul.f32 %v742, 0.6931472
    %v744 = vmul.f32 -0.5, %v612
    %v745 = vadd.f32 %v744, 1.0
    %v746 = vmul.f32 %v745, %v612
    %v747 = vand.u32 2147483647, %v612
    %vm748 = vcmp.lt.f32.partialorder %v747, 0.0004427343
    %v749 = vsel %vm748, %v746, %v743
    %v750 = vadd.f32 %v614, 1.0
    %v751 = vlog2.pop %v750
    %v752 = vmul.f32 %v751, 0.6931472
    %v753 = vmul.f32 -0.5, %v614
    %v754 = vadd.f32 %v753, 1.0
    %v755 = vmul.f32 %v754, %v614
    %v756 = vand.u32 2147483647, %v614
    %vm757 = vcmp.lt.f32.partialorder %v756, 0.0004427343
    %v758 = vsel %vm757, %v755, %v752
    %v759 = vadd.f32 %v535, %v623
    %v760 = vadd.f32 %v536, %v632
    %v761 = vadd.f32 %v537, %v641
    %v762 = vadd.f32 %v538, %v650
    %v763 = vadd.f32 %v539, %v659
    %v764 = vadd.f32 %v540, %v668
    %v765 = vadd.f32 %v541, %v677
    %v766 = vadd.f32 %v542, %v686
    %v767 = vadd.f32 %v543, %v695
    %v768 = vadd.f32 %v544, %v704
    %v769 = vadd.f32 %v545, %v713
    %v770 = vadd.f32 %v546, %v722
    %v771 = vadd.f32 %v547, %v731
    %v772 = vadd.f32 %v548, %v740
    %v773 = vadd.f32 %v549, %v749
    %v774 = vadd.f32 %v550, %v758
    %v775 = vmul.f32 %v324, %v759
    %v776 = vmul.f32 %v338, %v760
    %v777 = vmul.f32 %v352, %v761
    %v778 = vmul.f32 %v366, %v762
    %v779 = vmul.f32 %v380, %v763
    %v780 = vmul.f32 %v394, %v764
    %v781 = vmul.f32 %v408, %v765
    %v782 = vmul.f32 %v422, %v766
    %v783 = vmul.f32 %v436, %v767
    %v784 = vmul.f32 %v450, %v768
    %v785 = vmul.f32 %v464, %v769
    %v786 = vmul.f32 %v478, %v770
    %v787 = vmul.f32 %v492, %v771
    %v788 = vmul.f32 %v506, %v772
    %v789 = vmul.f32 %v520, %v773
    %v790 = vmul.f32 %v534, %v774
    %s791 = smul.u32 0, 8
    %v792 = vlaneseq
    %v793 = vshrl.u32 %v792, 7
    %v794 = vstv %s791
    %v795 = vadd.s32 %v794, %v793
    %v796 = vld [vmem:[%s2] sm:$0x1]
    %v797 = vperm.slane %v796, 0
    %vm798 = vcmp.eq.s32.totalorder %v795, %v797
    %v799 = vsel %vm798, 1, 0
    %v800 = vcvt.s32.f32 %v799
    %v801 = vld [vmem:[#allocation2] sm:$0xff]
    %802 = vmatpush.msra.mxu0 %v790
    %803 = vmatpush.msra.mxu0 %v789
    %804 = vmatpush.msra.mxu0 %v788
    %805 = vmatpush.msra.mxu0 %v787
    %806 = vmatpush.msra.mxu0 %v786
    %807 = vmatpush.msra.mxu0 %v785
    %808 = vmatpush.msra.mxu0 %v784
    %809 = vmatpush.msra.mxu0 %v783
    %810 = vmatpush.msra.mxu0 %v782
    %811 = vmatpush.msra.mxu0 %v781
    %812 = vmatpush.msra.mxu0 %v780
    %813 = vmatpush.msra.mxu0 %v779
    %814 = vmatpush.msra.mxu0 %v778
    %815 = vmatpush.msra.mxu0 %v777
    %816 = vmatpush.msra.mxu0 %v776
    %817 = vmatpush.msra.mxu0 %v775
    %818 = vmatmul.f32.gmra.mxu0 %v800
    %v819 = vpop.f32.mrf.mxu0
    %v820 = vadd.f32 0.0, %v819
    %821 = vdwg.mxu0
    %v822 = vadd.f32 %v801, %v820
    %823 = vst [vmem:[#allocation2] sm:$0xff] %v822
    // Predicated region
    $region26: #{tpu_custom_call.1} parent=1 // pred_check
      _
    $region27: #{tpu_custom_call.1} parent=1 // pred_check_branch
      %825 = sbr.rel (0) target = $region29
    $region28: #{tpu_custom_call.1} parent=1 // pred_region
      %827 = vsyncadd [#allocation3], 0
      %s829 = sshll.u32 [#allocation2], 4
      %s830 = int_to_ptr.vmem [resolvable:$true] %s829
      %s831 = sshll.u32 %s5, 4
      %s832 = int_to_ptr.hbm [resolvable:$true] %s831
      %834 = dma.vmem_to_hbm [thread:$0]  %s830, 128, %s832, [#allocation3]
    $region29: #{tpu_custom_call.1} parent=1 // pred_fallthru
      _
    // Predicated region
    $region30: #{tpu_custom_call.1} parent=1 // pred_check
      _
    $region31: #{tpu_custom_call.1} parent=1 // pred_check_branch
      %836 = sbr.rel (0) target = $region33
    $region32: #{tpu_custom_call.1} parent=1 // pred_region
      %838 = dma.done [#allocation3], 128
    $region33: #{tpu_custom_call.1} parent=1 // pred_fallthru
      _
    %839 = vsyncpa [#allocation3], 1

</llo_original>
